<compile_context>
chip_gen: v7x
topology: tpu7x:2x2x1
jax: 0.10.0
libtpu: 0.0.40
codegen_flags: <defaults>
</compile_context>

<pallas_src>
import jax
import jax.numpy as jnp
from jax.experimental import pallas as pl
from jax.experimental.pallas import tpu as pltpu

BN_EPS = 1e-5


def _round_up(n, m):
    return ((n + m - 1) // m) * m


# ----------------------------------------------------------------------------
# Kernel: (TB, F) f32 -> bf16 @ (F, H) -> relu -> @ (H, H) -> relu
#         -> @ (H, OUT_PAD) + bias -> store (TB, OUT_PAD)
# ----------------------------------------------------------------------------
def _mlp_kernel(x_ref, w1_ref, b1_ref, w2_ref, b2_ref, w3_ref, b3_ref, o_ref):
    # Cast to bf16 in-kernel (VPU work hidden under DMA/MXU); HBM read stays f32.
    x = x_ref[...].astype(jnp.bfloat16)                               # (TB, F)

    # fc1 (+ folded bn1) + relu1   (drop1 == identity in eval)
    h = jnp.dot(x, w1_ref[...], preferred_element_type=jnp.float32) + b1_ref[...]
    h = jnp.maximum(h, 0.0)

    # fc2 (+ folded bn2) + relu2   (drop2 == identity in eval)
    h = jnp.dot(h.astype(jnp.bfloat16), w2_ref[...],
                preferred_element_type=jnp.float32) + b2_ref[...]
    h = jnp.maximum(h, 0.0)

    # out projection (lane-padded to 128)
    o_ref[...] = (jnp.dot(h.astype(jnp.bfloat16), w3_ref[...],
                          preferred_element_type=jnp.float32)
                  + b3_ref[...]).astype(o_ref.dtype)


# ----------------------------------------------------------------------------
# Parameter prep: fold eval-mode BN into the linears, cast weights to bf16.
# ----------------------------------------------------------------------------
def _fold_and_cast(params):
    s1 = params["g1"] * jax.lax.rsqrt(params["v1"] + BN_EPS)          # (1, H)
    s2 = params["g2"] * jax.lax.rsqrt(params["v2"] + BN_EPS)          # (1, H)
    w1 = (params["w1"] * s1).astype(jnp.bfloat16)                     # (F, H)
    b1 = (params["b1"] - params["m1"]) * s1 + params["be1"]           # (1, H) f32
    w2 = (params["w2"] * s2).astype(jnp.bfloat16)                     # (H, H)
    b2 = (params["b2"] - params["m2"]) * s2 + params["be2"]           # (1, H) f32
    w3 = params["w3"].astype(jnp.bfloat16)                            # (H, O)
    b3 = params["b3"]                                                 # (1, O) f32
    return w1, b1, w2, b2, w3, b3


def _pick_batch_tile(B, block_b):
    """Batch tile that (a) divides B when possible (no wrapper-side pad of x),
    (b) is a multiple of 16 when it is not the full batch, and (c) gives >= 2
    grid steps for big-enough batches so both v7x TensorCores get work."""
    if B <= block_b:
        if B >= 32 and B % 32 == 0:
            return B // 2                      # 2 grid steps for megacore sharding
        return B                               # single full-batch tile (always legal)
    start = block_b - (block_b % 16)
    for tb in range(start, 15, -16):
        if B % tb == 0:
            return tb
    return start                               # fallback: ragged tail gets padded


def mlp_forward(x, params, *, block_b=1024, out_dtype=jnp.float32):
    """x: (B, input_dim) float32.  Returns (B, output_dim) in out_dtype."""
    B, F = x.shape
    H = params["w1"].shape[1]
    output_dim = params["w3"].shape[1]
    out_pad = _round_up(output_dim, 128)                              # lane-dense out

    w1, b1, w2, b2, w3, b3 = _fold_and_cast(params)
    if out_pad != output_dim:
        w3 = jnp.pad(w3, ((0, 0), (0, out_pad - output_dim)))
        b3 = jnp.pad(b3, ((0, 0), (0, out_pad - output_dim)))

    tb = _pick_batch_tile(B, block_b)
    b_pad = _round_up(B, tb)
    if b_pad != B:
        # Fallback only (no multiple-of-16 divisor of B <= block_b exists).
        x = jnp.pad(x, ((0, b_pad - B), (0, 0)))

    grid = (b_pad // tb,)
    resident = lambda i: (0, 0)   # weights/biases: same block every step -> fetched once
    # TODO(synk): mark the six resident specs pipeline_mode=pl.Buffered(1) once
    # single-buffered mode is confirmed stable on all targets (~0.5 MiB VMEM saving).

    out_bytes = jnp.dtype(out_dtype).itemsize
    flops = 2 * b_pad * (F * H + H * H + H * out_pad)
    bytes_accessed = (b_pad * F * 4                                   # x (f32, single read)
                      + (F * H + H * H + H * out_pad) * 2             # weights (bf16)
                      + (2 * H + out_pad) * 4                         # biases (f32)
                      + b_pad * out_pad * out_bytes)                  # output

    # Actual VMEM need + small headroom (no artificial floor); cap only at the
    # v7x physical per-TC VMEM of 64 MiB.
    weight_bytes = (F * H + H * H + H * out_pad) * 2 + (2 * H + out_pad) * 4
    vmem_bytes = int(2 * tb * F * 4                                   # double-buffered x tiles
                     + 2 * tb * out_pad * out_bytes                   # double-buffered out tiles
                     + 2 * weight_bytes                               # resident weight/bias blocks
                     + 4 * tb * H * 4                                 # f32 intermediates
                     + (2 << 20))                                     # headroom
    vmem_bytes = min(vmem_bytes, 64 << 20)

    out_padded = pl.pallas_call(
        _mlp_kernel,
        out_shape=jax.ShapeDtypeStruct((b_pad, out_pad), out_dtype),
        grid_spec=pltpu.PrefetchScalarGridSpec(
            num_scalar_prefetch=0,
            grid=grid,
            in_specs=[
                pl.BlockSpec((tb, F), lambda i: (i, 0)),              # x tile (pipelined, f32)
                pl.BlockSpec((F, H), resident),                       # w1 (BN-folded, bf16)
                pl.BlockSpec((1, H), resident),                       # b1 (BN-folded, f32)
                pl.BlockSpec((H, H), resident),                       # w2 (BN-folded, bf16)
                pl.BlockSpec((1, H), resident),                       # b2 (BN-folded, f32)
                pl.BlockSpec((H, out_pad), resident),                 # w3 (lane-padded, bf16)
                pl.BlockSpec((1, out_pad), resident),                 # b3 (lane-padded, f32)
            ],
            out_specs=pl.BlockSpec((tb, out_pad), lambda i: (i, 0)),
        ),
        compiler_params=pltpu.CompilerParams(
            # "parallel" lets the runtime shard batch tiles across v7x's 2 TCs;
            # _pick_batch_tile ensures >=2 grid steps when the batch allows.
            dimension_semantics=("parallel",),
            vmem_limit_bytes=vmem_bytes,
        ),
        cost_estimate=pl.CostEstimate(
            flops=flops, transcendentals=0, bytes_accessed=bytes_accessed),
    )(x, w1, b1, w2, b2, w3, b3)

    return out_padded[:B, :output_dim]


# ----------------------------------------------------------------------------
# Parameter init (matches MLP.init_weights + BatchNorm1d defaults)
# ----------------------------------------------------------------------------
def _xavier_uniform(key, fan_in, fan_out):
    # matches torch.nn.init.xavier_uniform_ (gain=1); stored as (in, out).
    limit = (6.0 / (fan_in + fan_out)) ** 0.5
    return jax.random.uniform(key, (fan_in, fan_out), jnp.float32, -limit, limit)


def init_mlp_params(key, input_dim, hidden_dim, output_dim):
    k1, k2, k3, k4, k5 = jax.random.split(key, 5)
    return {
        "w1": _xavier_uniform(k1, input_dim, hidden_dim),
        "b1": jnp.zeros((1, hidden_dim), jnp.float32),
        "w2": _xavier_uniform(k2, hidden_dim, hidden_dim),
        "b2": jnp.zeros((1, hidden_dim), jnp.float32),
        "w3": _xavier_uniform(k3, hidden_dim, output_dim),
        "b3": jnp.zeros((1, output_dim), jnp.float32),
        # BatchNorm1d: gamma=1, beta=0, running stats (mean made non-trivial
        # and deterministic so the folded-BN math is actually exercised).
        "g1": jnp.ones((1, hidden_dim), jnp.float32),
        "be1": jnp.zeros((1, hidden_dim), jnp.float32),
        "m1": 0.1 * jax.random.normal(k4, (1, hidden_dim), jnp.float32),
        "v1": jnp.ones((1, hidden_dim), jnp.float32),
        "g2": jnp.ones((1, hidden_dim), jnp.float32),
        "be2": jnp.zeros((1, hidden_dim), jnp.float32),
        "m2": 0.1 * jax.random.normal(k5, (1, hidden_dim), jnp.float32),
        "v2": jnp.ones((1, hidden_dim), jnp.float32),
    }


def _mlp_reference(x, params):
    """Pure-JAX f32 eval-mode reference (un-folded BN) for tolerance checking."""
    def bn(h, g, be, m, v):
        return (h - m) * jax.lax.rsqrt(v + BN_EPS) * g + be
    h = x @ params["w1"] + params["b1"]
    h = jnp.maximum(bn(h, params["g1"], params["be1"], params["m1"], params["v1"]), 0.0)
    h = h @ params["w2"] + params["b2"]
    h = jnp.maximum(bn(h, params["g2"], params["be2"], params["m2"], params["v2"]), 0.0)
    return h @ params["w3"] + params["b3"]


if __name__ == "__main__":
    # Small shapes consistent with the module: 12-lead ECG with 128 samples,
    # flattened to input_dim = 12 * 128 = 1536; hidden_dim=128; 9 classes (CPSC2018).
    B, LEADS, T = 8, 12, 128
    input_dim, hidden_dim, output_dim = LEADS * T, 128, 9

    key = jax.random.PRNGKey(0)
    kx, kp = jax.random.split(key)
    ecg = jax.random.normal(kx, (B, LEADS, T), jnp.float32)   # (B, 12, T) like PyTorch NCL
    x = ecg.reshape(B, -1)                                    # forward's x.view(B, -1)

    params = init_mlp_params(kp, input_dim, hidden_dim, output_dim)

    out = mlp_forward(x, params)
    jax.block_until_ready(out)
    assert out.shape == (B, output_dim)
    assert out.dtype == jnp.float32

    # Relative-error check (BN folding + bf16 matmul operands change numerics).
    ref = _mlp_reference(x, params)
    rel_err = float(jnp.max(jnp.abs(out - ref)) / (jnp.max(jnp.abs(ref)) + 1e-6))
    assert rel_err < 3e-2, f"relative error {rel_err} vs f32 reference"

    print("KERNEL_OK")
</pallas_src>

<mosaic_0001>
module attributes {stable_mosaic.version = 11 : i64} {
  func.func @_mlp_kernel(%arg0: i32, %arg1: memref<8x1536xf32, #tpu.memory_space<vmem>>, %arg2: memref<1536x128xbf16, #tpu.memory_space<vmem>>, %arg3: memref<1x128xf32, #tpu.memory_space<vmem>>, %arg4: memref<128x128xbf16, #tpu.memory_space<vmem>>, %arg5: memref<1x128xf32, #tpu.memory_space<vmem>>, %arg6: memref<128x128xbf16, #tpu.memory_space<vmem>>, %arg7: memref<1x128xf32, #tpu.memory_space<vmem>>, %arg8: memref<8x128xf32, #tpu.memory_space<vmem>>) attributes {dimension_semantics = [#tpu.dimension_semantics<parallel>], iteration_bounds = array<i64: 1>, scalar_prefetch = 0 : i64, scratch_operands = 0 : i64, tpu.core_type = #tpu.core_type<tc>, window_params = [{transform_indices = @transform_0, window_bounds = array<i64: 8, 1536>}, {pipeline_mode = #tpu.pipeline_mode<synchronous>, transform_indices = @transform_1, window_bounds = array<i64: 1536, 128>}, {pipeline_mode = #tpu.pipeline_mode<synchronous>, transform_indices = @transform_2, window_bounds = array<i64: 1, 128>}, {pipeline_mode = #tpu.pipeline_mode<synchronous>, transform_indices = @transform_3, window_bounds = array<i64: 128, 128>}, {pipeline_mode = #tpu.pipeline_mode<synchronous>, transform_indices = @transform_4, window_bounds = array<i64: 1, 128>}, {pipeline_mode = #tpu.pipeline_mode<synchronous>, transform_indices = @transform_5, window_bounds = array<i64: 128, 128>}, {pipeline_mode = #tpu.pipeline_mode<synchronous>, transform_indices = @transform_6, window_bounds = array<i64: 1, 128>}, {transform_indices = @transform_7, window_bounds = array<i64: 8, 128>}]} {
    %c0 = arith.constant 0 : index
    %c0_0 = arith.constant 0 : index
    %0 = vector.load %arg1[%c0, %c0_0] : memref<8x1536xf32, #tpu.memory_space<vmem>>, vector<8x1536xf32>
    %1 = arith.truncf %0 : vector<8x1536xf32> to vector<8x1536xbf16>
    %c0_1 = arith.constant 0 : index
    %c0_2 = arith.constant 0 : index
    %2 = vector.load %arg2[%c0_1, %c0_2] : memref<1536x128xbf16, #tpu.memory_space<vmem>>, vector<1536x128xbf16>
    %cst = arith.constant dense<0.000000e+00> : vector<8x128xf32>
    %3 = tpu.matmul %1, %2, %cst {dimension_numbers = #tpu.dot_dimension_numbers<[1], [0], [0], [1], [0, 0, 1, 1], [], []>} : vector<8x1536xbf16>, vector<1536x128xbf16>, vector<8x128xf32> -> vector<8x128xf32>
    %c0_3 = arith.constant 0 : index
    %c0_4 = arith.constant 0 : index
    %4 = vector.load %arg3[%c0_3, %c0_4] : memref<1x128xf32, #tpu.memory_space<vmem>>, vector<1x128xf32>
    %5 = vector.broadcast %4 : vector<1x128xf32> to vector<8x128xf32>
    %6 = arith.addf %3, %5 : vector<8x128xf32>
    %cst_5 = arith.constant 0.000000e+00 : f32
    %7 = vector.broadcast %cst_5 : f32 to vector<8x128xf32>
    %8 = arith.maximumf %6, %7 : vector<8x128xf32>
    %9 = arith.truncf %8 : vector<8x128xf32> to vector<8x128xbf16>
    %c0_6 = arith.constant 0 : index
    %c0_7 = arith.constant 0 : index
    %10 = vector.load %arg4[%c0_6, %c0_7] : memref<128x128xbf16, #tpu.memory_space<vmem>>, vector<128x128xbf16>
    %cst_8 = arith.constant dense<0.000000e+00> : vector<8x128xf32>
    %11 = tpu.matmul %9, %10, %cst_8 {dimension_numbers = #tpu.dot_dimension_numbers<[1], [0], [0], [1], [0, 0, 1, 1], [], []>} : vector<8x128xbf16>, vector<128x128xbf16>, vector<8x128xf32> -> vector<8x128xf32>
    %c0_9 = arith.constant 0 : index
    %c0_10 = arith.constant 0 : index
    %12 = vector.load %arg5[%c0_9, %c0_10] : memref<1x128xf32, #tpu.memory_space<vmem>>, vector<1x128xf32>
    %13 = vector.broadcast %12 : vector<1x128xf32> to vector<8x128xf32>
    %14 = arith.addf %11, %13 : vector<8x128xf32>
    %cst_11 = arith.constant 0.000000e+00 : f32
    %15 = vector.broadcast %cst_11 : f32 to vector<8x128xf32>
    %16 = arith.maximumf %14, %15 : vector<8x128xf32>
    %17 = arith.truncf %16 : vector<8x128xf32> to vector<8x128xbf16>
    %c0_12 = arith.constant 0 : index
    %c0_13 = arith.constant 0 : index
    %18 = vector.load %arg6[%c0_12, %c0_13] : memref<128x128xbf16, #tpu.memory_space<vmem>>, vector<128x128xbf16>
    %cst_14 = arith.constant dense<0.000000e+00> : vector<8x128xf32>
    %19 = tpu.matmul %17, %18, %cst_14 {dimension_numbers = #tpu.dot_dimension_numbers<[1], [0], [0], [1], [0, 0, 1, 1], [], []>} : vector<8x128xbf16>, vector<128x128xbf16>, vector<8x128xf32> -> vector<8x128xf32>
    %c0_15 = arith.constant 0 : index
    %c0_16 = arith.constant 0 : index
    %20 = vector.load %arg7[%c0_15, %c0_16] : memref<1x128xf32, #tpu.memory_space<vmem>>, vector<1x128xf32>
    %21 = vector.broadcast %20 : vector<1x128xf32> to vector<8x128xf32>
    %22 = arith.addf %19, %21 : vector<8x128xf32>
    %c0_17 = arith.constant 0 : index
    %c0_18 = arith.constant 0 : index
    %23 = vector.load %arg8[%c0_17, %c0_18] : memref<8x128xf32, #tpu.memory_space<vmem>>, vector<8x128xf32>
    tpu.vector_store %arg8[%c0_17, %c0_18], %22 {strides = array<i32>} : memref<8x128xf32, #tpu.memory_space<vmem>>, vector<8x128xf32>,
    return
  }
  func.func @transform_0(%arg0: i32) -> (i32, i32) {
    %c0_i32 = arith.constant 0 : i32
    %c0_i32_0 = arith.constant 0 : i32
    return %arg0, %c0_i32 : i32, i32
  }
  func.func @transform_1(%arg0: i32) -> (i32, i32) {
    %c0_i32 = arith.constant 0 : i32
    %c0_i32_0 = arith.constant 0 : i32
    %c0_i32_1 = arith.constant 0 : i32
    return %c0_i32, %c0_i32_0 : i32, i32
  }
  func.func @transform_2(%arg0: i32) -> (i32, i32) {
    %c0_i32 = arith.constant 0 : i32
    %c0_i32_0 = arith.constant 0 : i32
    %c0_i32_1 = arith.constant 0 : i32
    return %c0_i32, %c0_i32_0 : i32, i32
  }
  func.func @transform_3(%arg0: i32) -> (i32, i32) {
    %c0_i32 = arith.constant 0 : i32
    %c0_i32_0 = arith.constant 0 : i32
    %c0_i32_1 = arith.constant 0 : i32
    return %c0_i32, %c0_i32_0 : i32, i32
  }
  func.func @transform_4(%arg0: i32) -> (i32, i32) {
    %c0_i32 = arith.constant 0 : i32
    %c0_i32_0 = arith.constant 0 : i32
    %c0_i32_1 = arith.constant 0 : i32
    return %c0_i32, %c0_i32_0 : i32, i32
  }
  func.func @transform_5(%arg0: i32) -> (i32, i32) {
    %c0_i32 = arith.constant 0 : i32
    %c0_i32_0 = arith.constant 0 : i32
    %c0_i32_1 = arith.constant 0 : i32
    return %c0_i32, %c0_i32_0 : i32, i32
  }
  func.func @transform_6(%arg0: i32) -> (i32, i32) {
    %c0_i32 = arith.constant 0 : i32
    %c0_i32_0 = arith.constant 0 : i32
    %c0_i32_1 = arith.constant 0 : i32
    return %c0_i32, %c0_i32_0 : i32, i32
  }
  func.func @transform_7(%arg0: i32) -> (i32, i32) {
    %c0_i32 = arith.constant 0 : i32
    %c0_i32_0 = arith.constant 0 : i32
    return %arg0, %c0_i32 : i32, i32
  }
}

</mosaic_0001>

<llo_original>
// kernel: tpu_custom_call.1
$region0: #{tpu_custom_call.1}
  #allocation0 [shape = 'u32[]', space=smem, size = 0x4, offset = 0x4, fixed_abs, tag = 'smem constant byte address 0x4 - core index']
  #allocation1 [shape = 'u32[144,128]{1,0:T(1,128)}', space=vmem, size = 0x12000, scoped, tag = 'internal scratch']
  %s0 = inlined_call_operand.hbm [shape: f32[8,1536], index: 0, kind: input, shape index: {}]
  %s1 = inlined_call_operand.hbm [shape: bf16[1536,128], index: 1, kind: input, shape index: {}]
  %s2 = inlined_call_operand.vmem [shape: f32[1,128], index: 2, kind: input, shape index: {}]
  %s3 = inlined_call_operand.hbm [shape: bf16[128,128], index: 3, kind: input, shape index: {}]
  %s4 = inlined_call_operand.vmem [shape: f32[1,128], index: 4, kind: input, shape index: {}]
  %s5 = inlined_call_operand.hbm [shape: bf16[128,128], index: 5, kind: input, shape index: {}]
  %s6 = inlined_call_operand.vmem [shape: f32[1,128], index: 6, kind: input, shape index: {}]
  %s7 = inlined_call_operand.hbm [shape: f32[8,128], index: 7, kind: output, shape index: {}]
  %s8 = sld [smem:[#allocation0]]
  $region54: #{tpu_custom_call.1} parent=0
    _
  %s10 = ssub.s32 1, %s8
  %s11 = scalar_select 0, %s10, %s8
  $region1: #{tpu_custom_call.1} parent=0
    #allocation2 [shape = 'u8[49152]{0}', space=vmem, size = 0xc000, scoped, tag = 'input window, operand 0, single buffered']
    #allocation3 [shape = 's32[1]{0}', space=sflag, size = 0x4, scoped, tag = 'scoped memory for tpu_custom_call.1']
    #allocation4 [shape = 's32[1]{0}', space=sflag, size = 0x4, scoped, tag = 'scoped memory for tpu_custom_call.1']
    #allocation5 [shape = 'u8[393216]{0}', space=vmem, size = 0x60000, scoped, tag = 'input window, operand 1, single buffered']
    #allocation6 [shape = 's32[1]{0}', space=sflag, size = 0x4, scoped, tag = 'scoped memory for tpu_custom_call.1']
    #allocation7 [shape = 'u8[32768]{0}', space=vmem, size = 0x8000, scoped, tag = 'input window, operand 3, single buffered']
    #allocation8 [shape = 'u8[32768]{0}', space=vmem, size = 0x8000, scoped, tag = 'input window, operand 5, single buffered']
    #allocation9 [shape = 's32[1]{0}', space=sflag, size = 0x4, scoped, tag = 'scoped memory for tpu_custom_call.1']
    #allocation10 [shape = 'u8[4096]{0}', space=vmem, size = 0x1000, scoped, tag = 'output window, operand 0, single buffered']
    %12 = vsyncpa [#allocation3], 0
    %13 = vsyncpa [#allocation6], 0
    %14 = vsyncpa [#allocation9], 0
    %15 = vsyncpa [#allocation4], 0
    // Predicated region
    $region2: #{tpu_custom_call.1} parent=1 // pred_check
      _
    $region3: #{tpu_custom_call.1} parent=1 // pred_check_branch
      %17 = sbr.rel (0) target = $region5
    $region4: #{tpu_custom_call.1} parent=1 // pred_region
      %s19 = ssub.s32 1536, 1536
      %20 = vsyncadd [#allocation3], %s19
      %s22 = sshll.u32 [#allocation2], 4
      %s23 = int_to_ptr.vmem [resolvable:$true] %s22
      %25 = dma.hbm_to_vmem [thread:$0]  %s0, 1536, %s23, [#allocation3]
    $region5: #{tpu_custom_call.1} parent=1 // pred_fallthru
      _
    // Predicated region
    $region6: #{tpu_custom_call.1} parent=1 // pred_check
      _
    $region7: #{tpu_custom_call.1} parent=1 // pred_check_branch
      %27 = sbr.rel (0) target = $region9
    $region8: #{tpu_custom_call.1} parent=1 // pred_region
      %s29 = ssub.s32 12288, 12288
      %30 = vsyncadd [#allocation6], %s29
      %s31 = sshll.u32 [#allocation5], 4
      %s32 = int_to_ptr.vmem [resolvable:$true] %s31
      %37 = dma.hbm_to_vmem [thread:$0]  %s1, 12288, %s32, [#allocation6], 64, 64, 4
    $region9: #{tpu_custom_call.1} parent=1 // pred_fallthru
      _
    // Predicated region
    $region10: #{tpu_custom_call.1} parent=1 // pred_check
      _
    $region11: #{tpu_custom_call.1} parent=1 // pred_check_branch
      %39 = sbr.rel (0) target = $region13
    $region12: #{tpu_custom_call.1} parent=1 // pred_region
      _
    $region13: #{tpu_custom_call.1} parent=1 // pred_fallthru
      _
    // Predicated region
    $region14: #{tpu_custom_call.1} parent=1 // pred_check
      _
    $region15: #{tpu_custom_call.1} parent=1 // pred_check_branch
      %41 = sbr.rel (0) target = $region17
    $region16: #{tpu_custom_call.1} parent=1 // pred_region
      %s43 = ssub.s32 1024, 1024
      %44 = vsyncadd [#allocation6], %s43
      %s45 = sshll.u32 [#allocation7], 4
      %s46 = int_to_ptr.vmem [resolvable:$true] %s45
      %51 = dma.hbm_to_vmem [thread:$0]  %s3, 1024, %s46, [#allocation6], 64, 64, 4
    $region17: #{tpu_custom_call.1} parent=1 // pred_fallthru
      _
    // Predicated region
    $region18: #{tpu_custom_call.1} parent=1 // pred_check
      _
    $region19: #{tpu_custom_call.1} parent=1 // pred_check_branch
      %53 = sbr.rel (0) target = $region21
    $region20: #{tpu_custom_call.1} parent=1 // pred_region
      _
    $region21: #{tpu_custom_call.1} parent=1 // pred_fallthru
      _
    // Predicated region
    $region22: #{tpu_custom_call.1} parent=1 // pred_check
      _
    $region23: #{tpu_custom_call.1} parent=1 // pred_check_branch
      %55 = sbr.rel (0) target = $region25
    $region24: #{tpu_custom_call.1} parent=1 // pred_region
      %s57 = ssub.s32 1024, 1024
      %58 = vsyncadd [#allocation9], %s57
      %s59 = sshll.u32 [#allocation8], 4
      %s60 = int_to_ptr.vmem [resolvable:$true] %s59
      %65 = dma.hbm_to_vmem [thread:$0]  %s5, 1024, %s60, [#allocation9], 64, 64, 4
    $region25: #{tpu_custom_call.1} parent=1 // pred_fallthru
      _
    // Predicated region
    $region26: #{tpu_custom_call.1} parent=1 // pred_check
      _
    $region27: #{tpu_custom_call.1} parent=1 // pred_check_branch
      %67 = sbr.rel (0) target = $region29
    $region28: #{tpu_custom_call.1} parent=1 // pred_region
      _
    $region29: #{tpu_custom_call.1} parent=1 // pred_fallthru
      _
    // Predicated region
    $region30: #{tpu_custom_call.1} parent=1 // pred_check
      _
    $region31: #{tpu_custom_call.1} parent=1 // pred_check_branch
      %69 = sbr.rel (0) target = $region33
    $region32: #{tpu_custom_call.1} parent=1 // pred_region
      %70 = dma.done [#allocation3], 1536
    $region33: #{tpu_custom_call.1} parent=1 // pred_fallthru
      _
    // Predicated region
    $region34: #{tpu_custom_call.1} parent=1 // pred_check
      _
    $region35: #{tpu_custom_call.1} parent=1 // pred_check_branch
      %72 = sbr.rel (0) target = $region37
    $region36: #{tpu_custom_call.1} parent=1 // pred_region
      %73 = dma.done [#allocation6], 12288
    $region37: #{tpu_custom_call.1} parent=1 // pred_fallthru
      _
    // Predicated region
    $region38: #{tpu_custom_call.1} parent=1 // pred_check
      _
    $region39: #{tpu_custom_call.1} parent=1 // pred_check_branch
      %75 = sbr.rel (0) target = $region41
    $region40: #{tpu_custom_call.1} parent=1 // pred_region
      %76 = dma.done [#allocation6], 1024
    $region41: #{tpu_custom_call.1} parent=1 // pred_fallthru
      _
    // Predicated region
    $region42: #{tpu_custom_call.1} parent=1 // pred_check
      _
    $region43: #{tpu_custom_call.1} parent=1 // pred_check_branch
      %78 = sbr.rel (0) target = $region45
    $region44: #{tpu_custom_call.1} parent=1 // pred_region
      %79 = dma.done [#allocation9], 1024
    $region45: #{tpu_custom_call.1} parent=1 // pred_fallthru
      _
    %v81 = vld [vmem:[#allocation2] sm:$0xff]
    %v82 = vld [vmem:[#allocation2 + $0x8] sm:$0xff]
    %v83 = vld [vmem:[#allocation2 + $0x10] sm:$0xff]
    %v84 = vld [vmem:[#allocation2 + $0x18] sm:$0xff]
    %v85 = vld [vmem:[#allocation2 + $0x20] sm:$0xff]
    %v86 = vld [vmem:[#allocation2 + $0x28] sm:$0xff]
    %v87 = vld [vmem:[#allocation2 + $0x30] sm:$0xff]
    %v88 = vld [vmem:[#allocation2 + $0x38] sm:$0xff]
    %v89 = vld [vmem:[#allocation2 + $0x40] sm:$0xff]
    %v90 = vld [vmem:[#allocation2 + $0x48] sm:$0xff]
    %v91 = vld [vmem:[#allocation2 + $0x50] sm:$0xff]
    %v92 = vld [vmem:[#allocation2 + $0x58] sm:$0xff]
    %v93 = vpack.c.bf16 %v81, %v81
    %v94 = vpack.c.bf16 %v82, %v82
    %v95 = vpack.c.bf16 %v83, %v83
    %v96 = vpack.c.bf16 %v84, %v84
    %v97 = vpack.c.bf16 %v85, %v85
    %v98 = vpack.c.bf16 %v86, %v86
    %v99 = vpack.c.bf16 %v87, %v87
    %v100 = vpack.c.bf16 %v88, %v88
    %v101 = vpack.c.bf16 %v89, %v89
    %v102 = vpack.c.bf16 %v90, %v90
    %v103 = vpack.c.bf16 %v91, %v91
    %v104 = vpack.c.bf16 %v92, %v92
    %v105 = vld [vmem:[#allocation5] sm:$0xf]
    %v106 = vld [vmem:[#allocation5 + $0x4] sm:$0xf]
    %v107 = vld [vmem:[#allocation5 + $0x8] sm:$0xf]
    %v108 = vld [vmem:[#allocation5 + $0xc] sm:$0xf]
    %v109 = vld [vmem:[#allocation5 + $0x10] sm:$0xf]
    %v110 = vld [vmem:[#allocation5 + $0x14] sm:$0xf]
    %v111 = vld [vmem:[#allocation5 + $0x18] sm:$0xf]
    %v112 = vld [vmem:[#allocation5 + $0x1c] sm:$0xf]
    %v113 = vld [vmem:[#allocation5 + $0x20] sm:$0xf]
    %v114 = vld [vmem:[#allocation5 + $0x24] sm:$0xf]
    %v115 = vld [vmem:[#allocation5 + $0x28] sm:$0xf]
    %v116 = vld [vmem:[#allocation5 + $0x2c] sm:$0xf]
    %v117 = vld [vmem:[#allocation5 + $0x30] sm:$0xf]
    %v118 = vld [vmem:[#allocation5 + $0x34] sm:$0xf]
    %v119 = vld [vmem:[#allocation5 + $0x38] sm:$0xf]
    %v120 = vld [vmem:[#allocation5 + $0x3c] sm:$0xf]
    %v121 = vld [vmem:[#allocation5 + $0x40] sm:$0xf]
    %v122 = vld [vmem:[#allocation5 + $0x44] sm:$0xf]
    %v123 = vld [vmem:[#allocation5 + $0x48] sm:$0xf]
    %v124 = vld [vmem:[#allocation5 + $0x4c] sm:$0xf]
    %v125 = vld [vmem:[#allocation5 + $0x50] sm:$0xf]
    %v126 = vld [vmem:[#allocation5 + $0x54] sm:$0xf]
    %v127 = vld [vmem:[#allocation5 + $0x58] sm:$0xf]
    %v128 = vld [vmem:[#allocation5 + $0x5c] sm:$0xf]
    %v129 = vld [vmem:[#allocation5 + $0x60] sm:$0xf]
    %v130 = vld [vmem:[#allocation5 + $0x64] sm:$0xf]
    %v131 = vld [vmem:[#allocation5 + $0x68] sm:$0xf]
    %v132 = vld [vmem:[#allocation5 + $0x6c] sm:$0xf]
    %v133 = vld [vmem:[#allocation5 + $0x70] sm:$0xf]
    %v134 = vld [vmem:[#allocation5 + $0x74] sm:$0xf]
    %v135 = vld [vmem:[#allocation5 + $0x78] sm:$0xf]
    %v136 = vld [vmem:[#allocation5 + $0x7c] sm:$0xf]
    %v137 = vld [vmem:[#allocation5 + $0x80] sm:$0xf]
    %v138 = vld [vmem:[#allocation5 + $0x84] sm:$0xf]
    %v139 = vld [vmem:[#allocation5 + $0x88] sm:$0xf]
    %v140 = vld [vmem:[#allocation5 + $0x8c] sm:$0xf]
    %v141 = vld [vmem:[#allocation5 + $0x90] sm:$0xf]
    %v142 = vld [vmem:[#allocation5 + $0x94] sm:$0xf]
    %v143 = vld [vmem:[#allocation5 + $0x98] sm:$0xf]
    %v144 = vld [vmem:[#allocation5 + $0x9c] sm:$0xf]
    %v145 = vld [vmem:[#allocation5 + $0xa0] sm:$0xf]
    %v146 = vld [vmem:[#allocation5 + $0xa4] sm:$0xf]
    %v147 = vld [vmem:[#allocation5 + $0xa8] sm:$0xf]
    %v148 = vld [vmem:[#allocation5 + $0xac] sm:$0xf]
    %v149 = vld [vmem:[#allocation5 + $0xb0] sm:$0xf]
    %v150 = vld [vmem:[#allocation5 + $0xb4] sm:$0xf]
    %v151 = vld [vmem:[#allocation5 + $0xb8] sm:$0xf]
    %v152 = vld [vmem:[#allocation5 + $0xbc] sm:$0xf]
    %v153 = vld [vmem:[#allocation5 + $0xc0] sm:$0xf]
    %v154 = vld [vmem:[#allocation5 + $0xc4] sm:$0xf]
    %v155 = vld [vmem:[#allocation5 + $0xc8] sm:$0xf]
    %v156 = vld [vmem:[#allocation5 + $0xcc] sm:$0xf]
    %v157 = vld [vmem:[#allocation5 + $0xd0] sm:$0xf]
    %v158 = vld [vmem:[#allocation5 + $0xd4] sm:$0xf]
    %v159 = vld [vmem:[#allocation5 + $0xd8] sm:$0xf]
    %v160 = vld [vmem:[#allocation5 + $0xdc] sm:$0xf]
    %v161 = vld [vmem:[#allocation5 + $0xe0] sm:$0xf]
    %v162 = vld [vmem:[#allocation5 + $0xe4] sm:$0xf]
    %v163 = vld [vmem:[#allocation5 + $0xe8] sm:$0xf]
    %v164 = vld [vmem:[#allocation5 + $0xec] sm:$0xf]
    %v165 = vld [vmem:[#allocation5 + $0xf0] sm:$0xf]
    %v166 = vld [vmem:[#allocation5 + $0xf4] sm:$0xf]
    %v167 = vld [vmem:[#allocation5 + $0xf8] sm:$0xf]
    %v168 = vld [vmem:[#allocation5 + $0xfc] sm:$0xf]
    %v169 = vld [vmem:[#allocation5 + $0x100] sm:$0xf]
    %v170 = vld [vmem:[#allocation5 + $0x104] sm:$0xf]
    %v171 = vld [vmem:[#allocation5 + $0x108] sm:$0xf]
    %v172 = vld [vmem:[#allocation5 + $0x10c] sm:$0xf]
    %v173 = vld [vmem:[#allocation5 + $0x110] sm:$0xf]
    %v174 = vld [vmem:[#allocation5 + $0x114] sm:$0xf]
    %v175 = vld [vmem:[#allocation5 + $0x118] sm:$0xf]
    %v176 = vld [vmem:[#allocation5 + $0x11c] sm:$0xf]
    %v177 = vld [vmem:[#allocation5 + $0x120] sm:$0xf]
    %v178 = vld [vmem:[#allocation5 + $0x124] sm:$0xf]
    %v179 = vld [vmem:[#allocation5 + $0x128] sm:$0xf]
    %v180 = vld [vmem:[#allocation5 + $0x12c] sm:$0xf]
    %v181 = vld [vmem:[#allocation5 + $0x130] sm:$0xf]
    %v182 = vld [vmem:[#allocation5 + $0x134] sm:$0xf]
    %v183 = vld [vmem:[#allocation5 + $0x138] sm:$0xf]
    %v184 = vld [vmem:[#allocation5 + $0x13c] sm:$0xf]
    %v185 = vld [vmem:[#allocation5 + $0x140] sm:$0xf]
    %v186 = vld [vmem:[#allocation5 + $0x144] sm:$0xf]
    %v187 = vld [vmem:[#allocation5 + $0x148] sm:$0xf]
    %v188 = vld [vmem:[#allocation5 + $0x14c] sm:$0xf]
    %v189 = vld [vmem:[#allocation5 + $0x150] sm:$0xf]
    %v190 = vld [vmem:[#allocation5 + $0x154] sm:$0xf]
    %v191 = vld [vmem:[#allocation5 + $0x158] sm:$0xf]
    %v192 = vld [vmem:[#allocation5 + $0x15c] sm:$0xf]
    %v193 = vld [vmem:[#allocation5 + $0x160] sm:$0xf]
    %v194 = vld [vmem:[#allocation5 + $0x164] sm:$0xf]
    %v195 = vld [vmem:[#allocation5 + $0x168] sm:$0xf]
    %v196 = vld [vmem:[#allocation5 + $0x16c] sm:$0xf]
    %v197 = vld [vmem:[#allocation5 + $0x170] sm:$0xf]
    %v198 = vld [vmem:[#allocation5 + $0x174] sm:$0xf]
    %v199 = vld [vmem:[#allocation5 + $0x178] sm:$0xf]
    %v200 = vld [vmem:[#allocation5 + $0x17c] sm:$0xf]
    %v201 = vld [vmem:[#allocation5 + $0x180] sm:$0xf]
    %v202 = vld [vmem:[#allocation5 + $0x184] sm:$0xf]
    %v203 = vld [vmem:[#allocation5 + $0x188] sm:$0xf]
    %v204 = vld [vmem:[#allocation5 + $0x18c] sm:$0xf]
    %v205 = vld [vmem:[#allocation5 + $0x190] sm:$0xf]
    %v206 = vld [vmem:[#allocation5 + $0x194] sm:$0xf]
    %v207 = vld [vmem:[#allocation5 + $0x198] sm:$0xf]
    %v208 = vld [vmem:[#allocation5 + $0x19c] sm:$0xf]
    %v209 = vld [vmem:[#allocation5 + $0x1a0] sm:$0xf]
    %v210 = vld [vmem:[#allocation5 + $0x1a4] sm:$0xf]
    %v211 = vld [vmem:[#allocation5 + $0x1a8] sm:$0xf]
    %v212 = vld [vmem:[#allocation5 + $0x1ac] sm:$0xf]
    %v213 = vld [vmem:[#allocation5 + $0x1b0] sm:$0xf]
    %v214 = vld [vmem:[#allocation5 + $0x1b4] sm:$0xf]
    %v215 = vld [vmem:[#allocation5 + $0x1b8] sm:$0xf]
    %v216 = vld [vmem:[#allocation5 + $0x1bc] sm:$0xf]
    %v217 = vld [vmem:[#allocation5 + $0x1c0] sm:$0xf]
    %v218 = vld [vmem:[#allocation5 + $0x1c4] sm:$0xf]
    %v219 = vld [vmem:[#allocation5 + $0x1c8] sm:$0xf]
    %v220 = vld [vmem:[#allocation5 + $0x1cc] sm:$0xf]
    %v221 = vld [vmem:[#allocation5 + $0x1d0] sm:$0xf]
    %v222 = vld [vmem:[#allocation5 + $0x1d4] sm:$0xf]
    %v223 = vld [vmem:[#allocation5 + $0x1d8] sm:$0xf]
    %v224 = vld [vmem:[#allocation5 + $0x1dc] sm:$0xf]
    %v225 = vld [vmem:[#allocation5 + $0x1e0] sm:$0xf]
    %v226 = vld [vmem:[#allocation5 + $0x1e4] sm:$0xf]
    %v227 = vld [vmem:[#allocation5 + $0x1e8] sm:$0xf]
    %v228 = vld [vmem:[#allocation5 + $0x1ec] sm:$0xf]
    %v229 = vld [vmem:[#allocation5 + $0x1f0] sm:$0xf]
    %v230 = vld [vmem:[#allocation5 + $0x1f4] sm:$0xf]
    %v231 = vld [vmem:[#allocation5 + $0x1f8] sm:$0xf]
    %v232 = vld [vmem:[#allocation5 + $0x1fc] sm:$0xf]
    %v233 = vld [vmem:[#allocation5 + $0x200] sm:$0xf]
    %v234 = vld [vmem:[#allocation5 + $0x204] sm:$0xf]
    %v235 = vld [vmem:[#allocation5 + $0x208] sm:$0xf]
    %v236 = vld [vmem:[#allocation5 + $0x20c] sm:$0xf]
    %v237 = vld [vmem:[#allocation5 + $0x210] sm:$0xf]
    %v238 = vld [vmem:[#allocation5 + $0x214] sm:$0xf]
    %v239 = vld [vmem:[#allocation5 + $0x218] sm:$0xf]
    %v240 = vld [vmem:[#allocation5 + $0x21c] sm:$0xf]
    %v241 = vld [vmem:[#allocation5 + $0x220] sm:$0xf]
    %v242 = vld [vmem:[#allocation5 + $0x224] sm:$0xf]
    %v243 = vld [vmem:[#allocation5 + $0x228] sm:$0xf]
    %v244 = vld [vmem:[#allocation5 + $0x22c] sm:$0xf]
    %v245 = vld [vmem:[#allocation5 + $0x230] sm:$0xf]
    %v246 = vld [vmem:[#allocation5 + $0x234] sm:$0xf]
    %v247 = vld [vmem:[#allocation5 + $0x238] sm:$0xf]
    %v248 = vld [vmem:[#allocation5 + $0x23c] sm:$0xf]
    %v249 = vld [vmem:[#allocation5 + $0x240] sm:$0xf]
    %v250 = vld [vmem:[#allocation5 + $0x244] sm:$0xf]
    %v251 = vld [vmem:[#allocation5 + $0x248] sm:$0xf]
    %v252 = vld [vmem:[#allocation5 + $0x24c] sm:$0xf]
    %v253 = vld [vmem:[#allocation5 + $0x250] sm:$0xf]
    %v254 = vld [vmem:[#allocation5 + $0x254] sm:$0xf]
    %v255 = vld [vmem:[#allocation5 + $0x258] sm:$0xf]
    %v256 = vld [vmem:[#allocation5 + $0x25c] sm:$0xf]
    %v257 = vld [vmem:[#allocation5 + $0x260] sm:$0xf]
    %v258 = vld [vmem:[#allocation5 + $0x264] sm:$0xf]
    %v259 = vld [vmem:[#allocation5 + $0x268] sm:$0xf]
    %v260 = vld [vmem:[#allocation5 + $0x26c] sm:$0xf]
    %v261 = vld [vmem:[#allocation5 + $0x270] sm:$0xf]
    %v262 = vld [vmem:[#allocation5 + $0x274] sm:$0xf]
    %v263 = vld [vmem:[#allocation5 + $0x278] sm:$0xf]
    %v264 = vld [vmem:[#allocation5 + $0x27c] sm:$0xf]
    %v265 = vld [vmem:[#allocation5 + $0x280] sm:$0xf]
    %v266 = vld [vmem:[#allocation5 + $0x284] sm:$0xf]
    %v267 = vld [vmem:[#allocation5 + $0x288] sm:$0xf]
    %v268 = vld [vmem:[#allocation5 + $0x28c] sm:$0xf]
    %v269 = vld [vmem:[#allocation5 + $0x290] sm:$0xf]
    %v270 = vld [vmem:[#allocation5 + $0x294] sm:$0xf]
    %v271 = vld [vmem:[#allocation5 + $0x298] sm:$0xf]
    %v272 = vld [vmem:[#allocation5 + $0x29c] sm:$0xf]
    %v273 = vld [vmem:[#allocation5 + $0x2a0] sm:$0xf]
    %v274 = vld [vmem:[#allocation5 + $0x2a4] sm:$0xf]
    %v275 = vld [vmem:[#allocation5 + $0x2a8] sm:$0xf]
    %v276 = vld [vmem:[#allocation5 + $0x2ac] sm:$0xf]
    %v277 = vld [vmem:[#allocation5 + $0x2b0] sm:$0xf]
    %v278 = vld [vmem:[#allocation5 + $0x2b4] sm:$0xf]
    %v279 = vld [vmem:[#allocation5 + $0x2b8] sm:$0xf]
    %v280 = vld [vmem:[#allocation5 + $0x2bc] sm:$0xf]
    %v281 = vld [vmem:[#allocation5 + $0x2c0] sm:$0xf]
    %v282 = vld [vmem:[#allocation5 + $0x2c4] sm:$0xf]
    %v283 = vld [vmem:[#allocation5 + $0x2c8] sm:$0xf]
    %v284 = vld [vmem:[#allocation5 + $0x2cc] sm:$0xf]
    %v285 = vld [vmem:[#allocation5 + $0x2d0] sm:$0xf]
    %v286 = vld [vmem:[#allocation5 + $0x2d4] sm:$0xf]
    %v287 = vld [vmem:[#allocation5 + $0x2d8] sm:$0xf]
    %v288 = vld [vmem:[#allocation5 + $0x2dc] sm:$0xf]
    %v289 = vld [vmem:[#allocation5 + $0x2e0] sm:$0xf]
    %v290 = vld [vmem:[#allocation5 + $0x2e4] sm:$0xf]
    %v291 = vld [vmem:[#allocation5 + $0x2e8] sm:$0xf]
    %v292 = vld [vmem:[#allocation5 + $0x2ec] sm:$0xf]
    %v293 = vld [vmem:[#allocation5 + $0x2f0] sm:$0xf]
    %v294 = vld [vmem:[#allocation5 + $0x2f4] sm:$0xf]
    %v295 = vld [vmem:[#allocation5 + $0x2f8] sm:$0xf]
    %v296 = vld [vmem:[#allocation5 + $0x2fc] sm:$0xf]
    %v297 = vld [vmem:[%s2] sm:$0x1]
    %v299 = vlaneseq
    %v300 = vshrl.u32 %v299, 7
    %v301 = vsub.s32 0, %v300
    %v302 = vrot.slane %v297, %v301
    %v496 = vunpack.c.l.b16 %v105
    %v497 = vunpack.c.l.b16 %v106
    %v498 = vunpack.c.l.b16 %v107
    %v499 = vunpack.c.l.b16 %v108
    %v500 = vunpack.c.l.b16 %v109
    %v501 = vunpack.c.l.b16 %v110
    %v502 = vunpack.c.l.b16 %v111
    %v503 = vunpack.c.l.b16 %v112
    %v504 = vunpack.c.l.b16 %v113
    %v505 = vunpack.c.l.b16 %v114
    %v506 = vunpack.c.l.b16 %v115
    %v507 = vunpack.c.l.b16 %v116
    %v508 = vunpack.c.l.b16 %v117
    %v509 = vunpack.c.l.b16 %v118
    %v510 = vunpack.c.l.b16 %v119
    %v511 = vunpack.c.l.b16 %v120
    %v512 = vunpack.c.l.b16 %v121
    %v513 = vunpack.c.l.b16 %v122
    %v514 = vunpack.c.l.b16 %v123
    %v515 = vunpack.c.l.b16 %v124
    %v516 = vunpack.c.l.b16 %v125
    %v517 = vunpack.c.l.b16 %v126
    %v518 = vunpack.c.l.b16 %v127
    %v519 = vunpack.c.l.b16 %v128
    %v520 = vunpack.c.l.b16 %v129
    %v521 = vunpack.c.l.b16 %v130
    %v522 = vunpack.c.l.b16 %v131
    %v523 = vunpack.c.l.b16 %v132
    %v524 = vunpack.c.l.b16 %v133
    %v525 = vunpack.c.l.b16 %v134
    %v526 = vunpack.c.l.b16 %v135
    %v527 = vunpack.c.l.b16 %v136
    %v528 = vunpack.c.l.b16 %v137
    %v529 = vunpack.c.l.b16 %v138
    %v530 = vunpack.c.l.b16 %v139
    %v531 = vunpack.c.l.b16 %v140
    %v532 = vunpack.c.l.b16 %v141
    %v533 = vunpack.c.l.b16 %v142
    %v534 = vunpack.c.l.b16 %v143
    %v535 = vunpack.c.l.b16 %v144
    %v536 = vunpack.c.l.b16 %v145
    %v537 = vunpack.c.l.b16 %v146
    %v538 = vunpack.c.l.b16 %v147
    %v539 = vunpack.c.l.b16 %v148
    %v540 = vunpack.c.l.b16 %v149
    %v541 = vunpack.c.l.b16 %v150
    %v542 = vunpack.c.l.b16 %v151
    %v543 = vunpack.c.l.b16 %v152
    %v544 = vunpack.c.l.b16 %v153
    %v545 = vunpack.c.l.b16 %v154
    %v546 = vunpack.c.l.b16 %v155
    %v547 = vunpack.c.l.b16 %v156
    %v548 = vunpack.c.l.b16 %v157
    %v549 = vunpack.c.l.b16 %v158
    %v550 = vunpack.c.l.b16 %v159
    %v551 = vunpack.c.l.b16 %v160
    %v552 = vunpack.c.l.b16 %v161
    %v553 = vunpack.c.l.b16 %v162
    %v554 = vunpack.c.l.b16 %v163
    %v555 = vunpack.c.l.b16 %v164
    %v556 = vunpack.c.l.b16 %v165
    %v557 = vunpack.c.l.b16 %v166
    %v558 = vunpack.c.l.b16 %v167
    %v559 = vunpack.c.l.b16 %v168
    %v560 = vunpack.c.l.b16 %v169
    %v561 = vunpack.c.l.b16 %v170
    %v562 = vunpack.c.l.b16 %v171
    %v563 = vunpack.c.l.b16 %v172
    %v564 = vunpack.c.l.b16 %v173
    %v565 = vunpack.c.l.b16 %v174
    %v566 = vunpack.c.l.b16 %v175
    %v567 = vunpack.c.l.b16 %v176
    %v568 = vunpack.c.l.b16 %v177
    %v569 = vunpack.c.l.b16 %v178
    %v570 = vunpack.c.l.b16 %v179
    %v571 = vunpack.c.l.b16 %v180
    %v572 = vunpack.c.l.b16 %v181
    %v573 = vunpack.c.l.b16 %v182
    %v574 = vunpack.c.l.b16 %v183
    %v575 = vunpack.c.l.b16 %v184
    %v576 = vunpack.c.l.b16 %v185
    %v577 = vunpack.c.l.b16 %v186
    %v578 = vunpack.c.l.b16 %v187
    %v579 = vunpack.c.l.b16 %v188
    %v580 = vunpack.c.l.b16 %v189
    %v581 = vunpack.c.l.b16 %v190
    %v582 = vunpack.c.l.b16 %v191
    %v583 = vunpack.c.l.b16 %v192
    %v584 = vunpack.c.l.b16 %v193
    %v585 = vunpack.c.l.b16 %v194
    %v586 = vunpack.c.l.b16 %v195
    %v587 = vunpack.c.l.b16 %v196
    %v588 = vunpack.c.l.b16 %v197
    %v589 = vunpack.c.l.b16 %v198
    %v590 = vunpack.c.l.b16 %v199
    %v591 = vunpack.c.l.b16 %v200
    %v592 = vunpack.c.l.b16 %v201
    %v593 = vunpack.c.l.b16 %v202
    %v594 = vunpack.c.l.b16 %v203
    %v595 = vunpack.c.l.b16 %v204
    %v596 = vunpack.c.l.b16 %v205
    %v597 = vunpack.c.l.b16 %v206
    %v598 = vunpack.c.l.b16 %v207
    %v599 = vunpack.c.l.b16 %v208
    %v600 = vunpack.c.l.b16 %v209
    %v601 = vunpack.c.l.b16 %v210
    %v602 = vunpack.c.l.b16 %v211
    %v603 = vunpack.c.l.b16 %v212
    %v604 = vunpack.c.l.b16 %v213
    %v605 = vunpack.c.l.b16 %v214
    %v606 = vunpack.c.l.b16 %v215
    %v607 = vunpack.c.l.b16 %v216
    %v608 = vunpack.c.l.b16 %v217
    %v609 = vunpack.c.l.b16 %v218
    %v610 = vunpack.c.l.b16 %v219
    %v611 = vunpack.c.l.b16 %v220
    %v612 = vunpack.c.l.b16 %v221
    %v613 = vunpack.c.l.b16 %v222
    %v614 = vunpack.c.l.b16 %v223
    %v615 = vunpack.c.l.b16 %v224
    %v616 = vunpack.c.l.b16 %v225
    %v617 = vunpack.c.l.b16 %v226
    %v618 = vunpack.c.l.b16 %v227
    %v619 = vunpack.c.l.b16 %v228
    %v620 = vunpack.c.l.b16 %v229
    %v621 = vunpack.c.l.b16 %v230
    %v622 = vunpack.c.l.b16 %v231
    %v623 = vunpack.c.l.b16 %v232
    %v624 = vunpack.c.l.b16 %v233
    %v625 = vunpack.c.l.b16 %v234
    %v626 = vunpack.c.l.b16 %v235
    %v627 = vunpack.c.l.b16 %v236
    %v628 = vunpack.c.l.b16 %v237
    %v629 = vunpack.c.l.b16 %v238
    %v630 = vunpack.c.l.b16 %v239
    %v631 = vunpack.c.l.b16 %v240
    %v632 = vunpack.c.l.b16 %v241
    %v633 = vunpack.c.l.b16 %v242
    %v634 = vunpack.c.l.b16 %v243
    %v635 = vunpack.c.l.b16 %v244
    %v636 = vunpack.c.l.b16 %v245
    %v637 = vunpack.c.l.b16 %v246
    %v638 = vunpack.c.l.b16 %v247
    %v639 = vunpack.c.l.b16 %v248
    %v640 = vunpack.c.l.b16 %v249
    %v641 = vunpack.c.l.b16 %v250
    %v642 = vunpack.c.l.b16 %v251
    %v643 = vunpack.c.l.b16 %v252
    %v644 = vunpack.c.l.b16 %v253
    %v645 = vunpack.c.l.b16 %v254
    %v646 = vunpack.c.l.b16 %v255
    %v647 = vunpack.c.l.b16 %v256
    %v648 = vunpack.c.l.b16 %v257
    %v649 = vunpack.c.l.b16 %v258
    %v650 = vunpack.c.l.b16 %v259
    %v651 = vunpack.c.l.b16 %v260
    %v652 = vunpack.c.l.b16 %v261
    %v653 = vunpack.c.l.b16 %v262
    %v654 = vunpack.c.l.b16 %v263
    %v655 = vunpack.c.l.b16 %v264
    %v656 = vunpack.c.l.b16 %v265
    %v657 = vunpack.c.l.b16 %v266
    %v658 = vunpack.c.l.b16 %v267
    %v659 = vunpack.c.l.b16 %v268
    %v660 = vunpack.c.l.b16 %v269
    %v661 = vunpack.c.l.b16 %v270
    %v662 = vunpack.c.l.b16 %v271
    %v663 = vunpack.c.l.b16 %v272
    %v664 = vunpack.c.l.b16 %v273
    %v665 = vunpack.c.l.b16 %v274
    %v666 = vunpack.c.l.b16 %v275
    %v667 = vunpack.c.l.b16 %v276
    %v668 = vunpack.c.l.b16 %v277
    %v669 = vunpack.c.l.b16 %v278
    %v670 = vunpack.c.l.b16 %v279
    %v671 = vunpack.c.l.b16 %v280
    %v672 = vunpack.c.l.b16 %v281
    %v673 = vunpack.c.l.b16 %v282
    %v674 = vunpack.c.l.b16 %v283
    %v675 = vunpack.c.l.b16 %v284
    %v676 = vunpack.c.l.b16 %v285
    %v677 = vunpack.c.l.b16 %v286
    %v678 = vunpack.c.l.b16 %v287
    %v679 = vunpack.c.l.b16 %v288
    %v680 = vunpack.c.l.b16 %v289
    %v681 = vunpack.c.l.b16 %v290
    %v682 = vunpack.c.l.b16 %v291
    %v683 = vunpack.c.l.b16 %v292
    %v684 = vunpack.c.l.b16 %v293
    %v685 = vunpack.c.l.b16 %v294
    %v686 = vunpack.c.l.b16 %v295
    %v687 = vunpack.c.l.b16 %v296
    %v688 = vpack.c.b16 %v497, %v496
    %v689 = vpack.c.b16 %v499, %v498
    %v690 = vpack.c.b16 %v501, %v500
    %v691 = vpack.c.b16 %v503, %v502
    %v692 = vpack.c.b16 %v505, %v504
    %v693 = vpack.c.b16 %v507, %v506
    %v694 = vpack.c.b16 %v509, %v508
    %v695 = vpack.c.b16 %v511, %v510
    %v696 = vpack.c.b16 %v513, %v512
    %v697 = vpack.c.b16 %v515, %v514
    %v698 = vpack.c.b16 %v517, %v516
    %v699 = vpack.c.b16 %v519, %v518
    %v700 = vpack.c.b16 %v521, %v520
    %v701 = vpack.c.b16 %v523, %v522
    %v702 = vpack.c.b16 %v525, %v524
    %v703 = vpack.c.b16 %v527, %v526
    %v704 = vpack.c.b16 %v529, %v528
    %v705 = vpack.c.b16 %v531, %v530
    %v706 = vpack.c.b16 %v533, %v532
    %v707 = vpack.c.b16 %v535, %v534
    %v708 = vpack.c.b16 %v537, %v536
    %v709 = vpack.c.b16 %v539, %v538
    %v710 = vpack.c.b16 %v541, %v540
    %v711 = vpack.c.b16 %v543, %v542
    %v712 = vpack.c.b16 %v545, %v544
    %v713 = vpack.c.b16 %v547, %v546
    %v714 = vpack.c.b16 %v549, %v548
    %v715 = vpack.c.b16 %v551, %v550
    %v716 = vpack.c.b16 %v553, %v552
    %v717 = vpack.c.b16 %v555, %v554
    %v718 = vpack.c.b16 %v557, %v556
    %v719 = vpack.c.b16 %v559, %v558
    %v720 = vpack.c.b16 %v561, %v560
    %v721 = vpack.c.b16 %v563, %v562
    %v722 = vpack.c.b16 %v565, %v564
    %v723 = vpack.c.b16 %v567, %v566
    %v724 = vpack.c.b16 %v569, %v568
    %v725 = vpack.c.b16 %v571, %v570
    %v726 = vpack.c.b16 %v573, %v572
    %v727 = vpack.c.b16 %v575, %v574
    %v728 = vpack.c.b16 %v577, %v576
    %v729 = vpack.c.b16 %v579, %v578
    %v730 = vpack.c.b16 %v581, %v580
    %v731 = vpack.c.b16 %v583, %v582
    %v732 = vpack.c.b16 %v585, %v584
    %v733 = vpack.c.b16 %v587, %v586
    %v734 = vpack.c.b16 %v589, %v588
    %v735 = vpack.c.b16 %v591, %v590
    %v736 = vpack.c.b16 %v593, %v592
    %v737 = vpack.c.b16 %v595, %v594
    %v738 = vpack.c.b16 %v597, %v596
    %v739 = vpack.c.b16 %v599, %v598
    %v740 = vpack.c.b16 %v601, %v600
    %v741 = vpack.c.b16 %v603, %v602
    %v742 = vpack.c.b16 %v605, %v604
    %v743 = vpack.c.b16 %v607, %v606
    %v744 = vpack.c.b16 %v609, %v608
    %v745 = vpack.c.b16 %v611, %v610
    %v746 = vpack.c.b16 %v613, %v612
    %v747 = vpack.c.b16 %v615, %v614
    %v748 = vpack.c.b16 %v617, %v616
    %v749 = vpack.c.b16 %v619, %v618
    %v750 = vpack.c.b16 %v621, %v620
    %v751 = vpack.c.b16 %v623, %v622
    %v752 = vpack.c.b16 %v625, %v624
    %v753 = vpack.c.b16 %v627, %v626
    %v754 = vpack.c.b16 %v629, %v628
    %v755 = vpack.c.b16 %v631, %v630
    %v756 = vpack.c.b16 %v633, %v632
    %v757 = vpack.c.b16 %v635, %v634
    %v758 = vpack.c.b16 %v637, %v636
    %v759 = vpack.c.b16 %v639, %v638
    %v760 = vpack.c.b16 %v641, %v640
    %v761 = vpack.c.b16 %v643, %v642
    %v762 = vpack.c.b16 %v645, %v644
    %v763 = vpack.c.b16 %v647, %v646
    %v764 = vpack.c.b16 %v649, %v648
    %v765 = vpack.c.b16 %v651, %v650
    %v766 = vpack.c.b16 %v653, %v652
    %v767 = vpack.c.b16 %v655, %v654
    %v768 = vpack.c.b16 %v657, %v656
    %v769 = vpack.c.b16 %v659, %v658
    %v770 = vpack.c.b16 %v661, %v660
    %v771 = vpack.c.b16 %v663, %v662
    %v772 = vpack.c.b16 %v665, %v664
    %v773 = vpack.c.b16 %v667, %v666
    %v774 = vpack.c.b16 %v669, %v668
    %v775 = vpack.c.b16 %v671, %v670
    %v776 = vpack.c.b16 %v673, %v672
    %v777 = vpack.c.b16 %v675, %v674
    %v778 = vpack.c.b16 %v677, %v676
    %v779 = vpack.c.b16 %v679, %v678
    %v780 = vpack.c.b16 %v681, %v680
    %v781 = vpack.c.b16 %v683, %v682
    %v782 = vpack.c.b16 %v685, %v684
    %v783 = vpack.c.b16 %v687, %v686
    %880 = vmatprep.subr.bf16.mxu0 0
    %881 = vmatpush1.bf16.msra.mxu0 %v688
    %882 = vmatprep.subr.bf16.mxu0 0
    %883 = vmatpush1.bf16.msra.mxu0 %v689
    %884 = vmatprep.subr.bf16.mxu0 0
    %885 = vmatpush1.bf16.msra.mxu0 %v690
    %886 = vmatprep.subr.bf16.mxu0 0
    %887 = vmatpush1.bf16.msra.mxu0 %v691
    %888 = vmatprep.subr.bf16.mxu0 0
    %889 = vmatpush1.bf16.msra.mxu0 %v692
    %890 = vmatprep.subr.bf16.mxu0 0
    %891 = vmatpush1.bf16.msra.mxu0 %v693
    %892 = vmatprep.subr.bf16.mxu0 0
    %893 = vmatpush1.bf16.msra.mxu0 %v694
    %894 = vmatprep.subr.bf16.mxu0 0
    %895 = vmatpush1.bf16.msra.mxu0 %v695
    %896 = vmatprep.subr.bf16.mxu0 0
    %897 = vmatpush1.bf16.msra.mxu0 %v696
    %898 = vmatprep.subr.bf16.mxu0 0
    %899 = vmatpush1.bf16.msra.mxu0 %v697
    %900 = vmatprep.subr.bf16.mxu0 0
    %901 = vmatpush1.bf16.msra.mxu0 %v698
    %902 = vmatprep.subr.bf16.mxu0 0
    %903 = vmatpush1.bf16.msra.mxu0 %v699
    %904 = vmatprep.subr.bf16.mxu0 0
    %905 = vmatpush1.bf16.msra.mxu0 %v700
    %906 = vmatprep.subr.bf16.mxu0 0
    %907 = vmatpush1.bf16.msra.mxu0 %v701
    %908 = vmatprep.subr.bf16.mxu0 0
    %909 = vmatpush1.bf16.msra.mxu0 %v702
    %910 = vmatprep.subr.bf16.mxu0 0
    %911 = vmatpush1.bf16.msra.mxu0 %v703
    %912 = vmatprep.mubr.bf16.mxu0 %v94
    %913 = vmatmul.mubr.bf16.gmra.mrb[0].mxu0 %v93
    %v914 = vpop.f32.mrb[0].mxu0
    %v915 = vadd.f32 %v302, %v914
    %v916 = vpop.f32.mrb[0].mxu0
    %v917 = vpop.f32.mrb[0].mxu0
    %v918 = vpop.f32.mrb[0].mxu0
    %919 = vdwg.mxu0
    %920 = vmatprep.subr.bf16.mxu0 0
    %921 = vmatpush1.bf16.msra.mxu0 %v704
    %922 = vmatprep.subr.bf16.mxu0 0
    %923 = vmatpush1.bf16.msra.mxu0 %v705
    %924 = vmatprep.subr.bf16.mxu0 0
    %925 = vmatpush1.bf16.msra.mxu0 %v706
    %926 = vmatprep.subr.bf16.mxu0 0
    %927 = vmatpush1.bf16.msra.mxu0 %v707
    %928 = vmatprep.subr.bf16.mxu0 0
    %929 = vmatpush1.bf16.msra.mxu0 %v708
    %930 = vmatprep.subr.bf16.mxu0 0
    %931 = vmatpush1.bf16.msra.mxu0 %v709
    %932 = vmatprep.subr.bf16.mxu0 0
    %933 = vmatpush1.bf16.msra.mxu0 %v710
    %934 = vmatprep.subr.bf16.mxu0 0
    %935 = vmatpush1.bf16.msra.mxu0 %v711
    %936 = vmatprep.subr.bf16.mxu0 0
    %937 = vmatpush1.bf16.msra.mxu0 %v712
    %938 = vmatprep.subr.bf16.mxu0 0
    %939 = vmatpush1.bf16.msra.mxu0 %v713
    %940 = vmatprep.subr.bf16.mxu0 0
    %941 = vmatpush1.bf16.msra.mxu0 %v714
    %942 = vmatprep.subr.bf16.mxu0 0
    %943 = vmatpush1.bf16.msra.mxu0 %v715
    %944 = vmatprep.subr.bf16.mxu0 0
    %945 = vmatpush1.bf16.msra.mxu0 %v716
    %946 = vmatprep.subr.bf16.mxu0 0
    %947 = vmatpush1.bf16.msra.mxu0 %v717
    %948 = vmatprep.subr.bf16.mxu0 0
    %949 = vmatpush1.bf16.msra.mxu0 %v718
    %950 = vmatprep.subr.bf16.mxu0 0
    %951 = vmatpush1.bf16.msra.mxu0 %v719
    %952 = vmatprep.mubr.bf16.mxu0 %v96
    %953 = vmatmul.mubr.bf16.gmra.mrb[0].mxu0 %v95
    %v954 = vpop.f32.mrb[0].mxu0
    %v955 = vadd.f32 %v915, %v954
    %v956 = vpop.f32.mrb[0].mxu0
    %v957 = vpop.f32.mrb[0].mxu0
    %v958 = vpop.f32.mrb[0].mxu0
    %959 = vdwg.mxu0
    %960 = vmatprep.subr.bf16.mxu0 0
    %961 = vmatpush1.bf16.msra.mxu0 %v720
    %962 = vmatprep.subr.bf16.mxu0 0
    %963 = vmatpush1.bf16.msra.mxu0 %v721
    %964 = vmatprep.subr.bf16.mxu0 0
    %965 = vmatpush1.bf16.msra.mxu0 %v722
    %966 = vmatprep.subr.bf16.mxu0 0
    %967 = vmatpush1.bf16.msra.mxu0 %v723
    %968 = vmatprep.subr.bf16.mxu0 0
    %969 = vmatpush1.bf16.msra.mxu0 %v724
    %970 = vmatprep.subr.bf16.mxu0 0
    %971 = vmatpush1.bf16.msra.mxu0 %v725
    %972 = vmatprep.subr.bf16.mxu0 0
    %973 = vmatpush1.bf16.msra.mxu0 %v726
    %974 = vmatprep.subr.bf16.mxu0 0
    %975 = vmatpush1.bf16.msra.mxu0 %v727
    %976 = vmatprep.subr.bf16.mxu0 0
    %977 = vmatpush1.bf16.msra.mxu0 %v728
    %978 = vmatprep.subr.bf16.mxu0 0
    %979 = vmatpush1.bf16.msra.mxu0 %v729
    %980 = vmatprep.subr.bf16.mxu0 0
    %981 = vmatpush1.bf16.msra.mxu0 %v730
    %982 = vmatprep.subr.bf16.mxu0 0
    %983 = vmatpush1.bf16.msra.mxu0 %v731
    %984 = vmatprep.subr.bf16.mxu0 0
    %985 = vmatpush1.bf16.msra.mxu0 %v732
    %986 = vmatprep.subr.bf16.mxu0 0
    %987 = vmatpush1.bf16.msra.mxu0 %v733
    %988 = vmatprep.subr.bf16.mxu0 0
    %989 = vmatpush1.bf16.msra.mxu0 %v734
    %990 = vmatprep.subr.bf16.mxu0 0
    %991 = vmatpush1.bf16.msra.mxu0 %v735
    %992 = vmatprep.mubr.bf16.mxu0 %v98
    %993 = vmatmul.mubr.bf16.gmra.mrb[0].mxu0 %v97
    %v994 = vpop.f32.mrb[0].mxu0
    %v995 = vadd.f32 %v955, %v994
    %v996 = vpop.f32.mrb[0].mxu0
    %v997 = vpop.f32.mrb[0].mxu0
    %v998 = vpop.f32.mrb[0].mxu0
    %999 = vdwg.mxu0
    %1000 = vmatprep.subr.bf16.mxu0 0
    %1001 = vmatpush1.bf16.msra.mxu0 %v736
    %1002 = vmatprep.subr.bf16.mxu0 0
    %1003 = vmatpush1.bf16.msra.mxu0 %v737
    %1004 = vmatprep.subr.bf16.mxu0 0
    %1005 = vmatpush1.bf16.msra.mxu0 %v738
    %1006 = vmatprep.subr.bf16.mxu0 0
    %1007 = vmatpush1.bf16.msra.mxu0 %v739
    %1008 = vmatprep.subr.bf16.mxu0 0
    %1009 = vmatpush1.bf16.msra.mxu0 %v740
    %1010 = vmatprep.subr.bf16.mxu0 0
    %1011 = vmatpush1.bf16.msra.mxu0 %v741
    %1012 = vmatprep.subr.bf16.mxu0 0
    %1013 = vmatpush1.bf16.msra.mxu0 %v742
    %1014 = vmatprep.subr.bf16.mxu0 0
    %1015 = vmatpush1.bf16.msra.mxu0 %v743
    %1016 = vmatprep.subr.bf16.mxu0 0
    %1017 = vmatpush1.bf16.msra.mxu0 %v744
    %1018 = vmatprep.subr.bf16.mxu0 0
    %1019 = vmatpush1.bf16.msra.mxu0 %v745
    %1020 = vmatprep.subr.bf16.mxu0 0
    %1021 = vmatpush1.bf16.msra.mxu0 %v746
    %1022 = vmatprep.subr.bf16.mxu0 0
    %1023 = vmatpush1.bf16.msra.mxu0 %v747
    %1024 = vmatprep.subr.bf16.mxu0 0
    %1025 = vmatpush1.bf16.msra.mxu0 %v748
    %1026 = vmatprep.subr.bf16.mxu0 0
    %1027 = vmatpush1.bf16.msra.mxu0 %v749
    %1028 = vmatprep.subr.bf16.mxu0 0
    %1029 = vmatpush1.bf16.msra.mxu0 %v750
    %1030 = vmatprep.subr.bf16.mxu0 0
    %1031 = vmatpush1.bf16.msra.mxu0 %v751
    %1032 = vmatprep.mubr.bf16.mxu0 %v100
    %1033 = vmatmul.mubr.bf16.gmra.mrb[0].mxu0 %v99
    %v1034 = vpop.f32.mrb[0].mxu0
    %v1035 = vadd.f32 %v995, %v1034
    %v1036 = vpop.f32.mrb[0].mxu0
    %v1037 = vpop.f32.mrb[0].mxu0
    %v1038 = vpop.f32.mrb[0].mxu0
    %1039 = vdwg.mxu0
    %1040 = vmatprep.subr.bf16.mxu0 0
    %1041 = vmatpush1.bf16.msra.mxu0 %v752
    %1042 = vmatprep.subr.bf16.mxu0 0
    %1043 = vmatpush1.bf16.msra.mxu0 %v753
    %1044 = vmatprep.subr.bf16.mxu0 0
    %1045 = vmatpush1.bf16.msra.mxu0 %v754
    %1046 = vmatprep.subr.bf16.mxu0 0
    %1047 = vmatpush1.bf16.msra.mxu0 %v755
    %1048 = vmatprep.subr.bf16.mxu0 0
    %1049 = vmatpush1.bf16.msra.mxu0 %v756
    %1050 = vmatprep.subr.bf16.mxu0 0
    %1051 = vmatpush1.bf16.msra.mxu0 %v757
    %1052 = vmatprep.subr.bf16.mxu0 0
    %1053 = vmatpush1.bf16.msra.mxu0 %v758
    %1054 = vmatprep.subr.bf16.mxu0 0
    %1055 = vmatpush1.bf16.msra.mxu0 %v759
    %1056 = vmatprep.subr.bf16.mxu0 0
    %1057 = vmatpush1.bf16.msra.mxu0 %v760
    %1058 = vmatprep.subr.bf16.mxu0 0
    %1059 = vmatpush1.bf16.msra.mxu0 %v761
    %1060 = vmatprep.subr.bf16.mxu0 0
    %1061 = vmatpush1.bf16.msra.mxu0 %v762
    %1062 = vmatprep.subr.bf16.mxu0 0
    %1063 = vmatpush1.bf16.msra.mxu0 %v763
    %1064 = vmatprep.subr.bf16.mxu0 0
    %1065 = vmatpush1.bf16.msra.mxu0 %v764
    %1066 = vmatprep.subr.bf16.mxu0 0
    %1067 = vmatpush1.bf16.msra.mxu0 %v765
    %1068 = vmatprep.subr.bf16.mxu0 0
    %1069 = vmatpush1.bf16.msra.mxu0 %v766
    %1070 = vmatprep.subr.bf16.mxu0 0
    %1071 = vmatpush1.bf16.msra.mxu0 %v767
    %1072 = vmatprep.mubr.bf16.mxu0 %v102
    %1073 = vmatmul.mubr.bf16.gmra.mrb[0].mxu0 %v101
    %v1074 = vpop.f32.mrb[0].mxu0
    %v1075 = vadd.f32 %v1035, %v1074
    %v1076 = vpop.f32.mrb[0].mxu0
    %v1077 = vpop.f32.mrb[0].mxu0
    %v1078 = vpop.f32.mrb[0].mxu0
    %1079 = vdwg.mxu0
    %1080 = vmatprep.subr.bf16.mxu0 0
    %1081 = vmatpush1.bf16.msra.mxu0 %v768
    %1082 = vmatprep.subr.bf16.mxu0 0
    %1083 = vmatpush1.bf16.msra.mxu0 %v769
    %1084 = vmatprep.subr.bf16.mxu0 0
    %1085 = vmatpush1.bf16.msra.mxu0 %v770
    %1086 = vmatprep.subr.bf16.mxu0 0
    %1087 = vmatpush1.bf16.msra.mxu0 %v771
    %1088 = vmatprep.subr.bf16.mxu0 0
    %1089 = vmatpush1.bf16.msra.mxu0 %v772
    %1090 = vmatprep.subr.bf16.mxu0 0
    %1091 = vmatpush1.bf16.msra.mxu0 %v773
    %1092 = vmatprep.subr.bf16.mxu0 0
    %1093 = vmatpush1.bf16.msra.mxu0 %v774
    %1094 = vmatprep.subr.bf16.mxu0 0
    %1095 = vmatpush1.bf16.msra.mxu0 %v775
    %1096 = vmatprep.subr.bf16.mxu0 0
    %1097 = vmatpush1.bf16.msra.mxu0 %v776
    %1098 = vmatprep.subr.bf16.mxu0 0
    %1099 = vmatpush1.bf16.msra.mxu0 %v777
    %1100 = vmatprep.subr.bf16.mxu0 0
    %1101 = vmatpush1.bf16.msra.mxu0 %v778
    %1102 = vmatprep.subr.bf16.mxu0 0
    %1103 = vmatpush1.bf16.msra.mxu0 %v779
    %1104 = vmatprep.subr.bf16.mxu0 0
    %1105 = vmatpush1.bf16.msra.mxu0 %v780
    %1106 = vmatprep.subr.bf16.mxu0 0
    %1107 = vmatpush1.bf16.msra.mxu0 %v781
    %1108 = vmatprep.subr.bf16.mxu0 0
    %1109 = vmatpush1.bf16.msra.mxu0 %v782
    %1110 = vmatprep.subr.bf16.mxu0 0
    %1111 = vmatpush1.bf16.msra.mxu0 %v783
    %1112 = vmatprep.mubr.bf16.mxu0 %v104
    %1113 = vmatmul.mubr.bf16.gmra.mrb[0].mxu0 %v103
    %v1114 = vpop.f32.mrb[0].mxu0
    %v1115 = vadd.f32 %v1075, %v1114
    %v1116 = vpop.f32.mrb[0].mxu0
    %v1117 = vpop.f32.mrb[0].mxu0
    %v1118 = vpop.f32.mrb[0].mxu0
    %1119 = vdwg.mxu0
    %v1120 = vmax.f32 %v1115, 0.0
    %v1121 = vpack.c.bf16 %v1120, %v1120
    %v1122 = vld [vmem:[#allocation7] sm:$0xf]
    %v1123 = vld [vmem:[#allocation7 + $0x4] sm:$0xf]
    %v1124 = vld [vmem:[#allocation7 + $0x8] sm:$0xf]
    %v1125 = vld [vmem:[#allocation7 + $0xc] sm:$0xf]
    %v1126 = vld [vmem:[#allocation7 + $0x10] sm:$0xf]
    %v1127 = vld [vmem:[#allocation7 + $0x14] sm:$0xf]
    %v1128 = vld [vmem:[#allocation7 + $0x18] sm:$0xf]
    %v1129 = vld [vmem:[#allocation7 + $0x1c] sm:$0xf]
    %v1130 = vld [vmem:[#allocation7 + $0x20] sm:$0xf]
    %v1131 = vld [vmem:[#allocation7 + $0x24] sm:$0xf]
    %v1132 = vld [vmem:[#allocation7 + $0x28] sm:$0xf]
    %v1133 = vld [vmem:[#allocation7 + $0x2c] sm:$0xf]
    %v1134 = vld [vmem:[#allocation7 + $0x30] sm:$0xf]
    %v1135 = vld [vmem:[#allocation7 + $0x34] sm:$0xf]
    %v1136 = vld [vmem:[#allocation7 + $0x38] sm:$0xf]
    %v1137 = vld [vmem:[#allocation7 + $0x3c] sm:$0xf]
    %v1138 = vld [vmem:[%s4] sm:$0x1]
    %v1140 = vlaneseq
    %v1141 = vshrl.u32 %v1140, 7
    %v1142 = vsub.s32 0, %v1141
    %v1143 = vrot.slane %v1138, %v1142
    %v1161 = vunpack.c.l.b16 %v1122
    %v1162 = vunpack.c.l.b16 %v1123
    %v1163 = vunpack.c.l.b16 %v1124
    %v1164 = vunpack.c.l.b16 %v1125
    %v1165 = vunpack.c.l.b16 %v1126
    %v1166 = vunpack.c.l.b16 %v1127
    %v1167 = vunpack.c.l.b16 %v1128
    %v1168 = vunpack.c.l.b16 %v1129
    %v1169 = vunpack.c.l.b16 %v1130
    %v1170 = vunpack.c.l.b16 %v1131
    %v1171 = vunpack.c.l.b16 %v1132
    %v1172 = vunpack.c.l.b16 %v1133
    %v1173 = vunpack.c.l.b16 %v1134
    %v1174 = vunpack.c.l.b16 %v1135
    %v1175 = vunpack.c.l.b16 %v1136
    %v1176 = vunpack.c.l.b16 %v1137
    %v1177 = vpack.c.b16 %v1162, %v1161
    %v1178 = vpack.c.b16 %v1164, %v1163
    %v1179 = vpack.c.b16 %v1166, %v1165
    %v1180 = vpack.c.b16 %v1168, %v1167
    %v1181 = vpack.c.b16 %v1170, %v1169
    %v1182 = vpack.c.b16 %v1172, %v1171
    %v1183 = vpack.c.b16 %v1174, %v1173
    %v1184 = vpack.c.b16 %v1176, %v1175
    %1193 = vmatprep.subr.bf16.mxu0 0
    %1194 = vmatpush1.bf16.msra.mxu0 %v1177
    %1195 = vmatprep.subr.bf16.mxu0 0
    %1196 = vmatpush1.bf16.msra.mxu0 %v1178
    %1197 = vmatprep.subr.bf16.mxu0 0
    %1198 = vmatpush1.bf16.msra.mxu0 %v1179
    %1199 = vmatprep.subr.bf16.mxu0 0
    %1200 = vmatpush1.bf16.msra.mxu0 %v1180
    %1201 = vmatprep.subr.bf16.mxu0 0
    %1202 = vmatpush1.bf16.msra.mxu0 %v1181
    %1203 = vmatprep.subr.bf16.mxu0 0
    %1204 = vmatpush1.bf16.msra.mxu0 %v1182
    %1205 = vmatprep.subr.bf16.mxu0 0
    %1206 = vmatpush1.bf16.msra.mxu0 %v1183
    %1207 = vmatprep.subr.bf16.mxu0 0
    %1208 = vmatpush1.bf16.msra.mxu0 %v1184
    %1209 = vmatprep.subr.bf16.mxu0 0
    %1210 = vmatpush1.bf16.msra.mxu0 0
    %1211 = vmatprep.subr.bf16.mxu0 0
    %1212 = vmatpush1.bf16.msra.mxu0 0
    %1213 = vmatprep.subr.bf16.mxu0 0
    %1214 = vmatpush1.bf16.msra.mxu0 0
    %1215 = vmatprep.subr.bf16.mxu0 0
    %1216 = vmatpush1.bf16.msra.mxu0 0
    %1217 = vmatprep.subr.bf16.mxu0 0
    %1218 = vmatpush1.bf16.msra.mxu0 0
    %1219 = vmatprep.subr.bf16.mxu0 0
    %1220 = vmatpush1.bf16.msra.mxu0 0
    %1221 = vmatprep.subr.bf16.mxu0 0
    %1222 = vmatpush1.bf16.msra.mxu0 0
    %1223 = vmatprep.subr.bf16.mxu0 0
    %1224 = vmatpush1.bf16.msra.mxu0 0
    %1225 = vmatprep.mubr.bf16.mxu0 0
    %1226 = vmatmul.mubr.bf16.gmra.mrb[0].mxu0 %v1121
    %v1227 = vpop.f32.mrb[0].mxu0
    %v1228 = vadd.f32 %v1143, %v1227
    %v1229 = vpop.f32.mrb[0].mxu0
    %v1230 = vpop.f32.mrb[0].mxu0
    %v1231 = vpop.f32.mrb[0].mxu0
    %1232 = vdwg.mxu0
    %v1233 = vmax.f32 %v1228, 0.0
    %v1234 = vpack.c.bf16 %v1233, %v1233
    %v1235 = vld [vmem:[#allocation8] sm:$0xf]
    %v1236 = vld [vmem:[#allocation8 + $0x4] sm:$0xf]
    %v1237 = vld [vmem:[#allocation8 + $0x8] sm:$0xf]
    %v1238 = vld [vmem:[#allocation8 + $0xc] sm:$0xf]
    %v1239 = vld [vmem:[#allocation8 + $0x10] sm:$0xf]
    %v1240 = vld [vmem:[#allocation8 + $0x14] sm:$0xf]
    %v1241 = vld [vmem:[#allocation8 + $0x18] sm:$0xf]
    %v1242 = vld [vmem:[#allocation8 + $0x1c] sm:$0xf]
    %v1243 = vld [vmem:[#allocation8 + $0x20] sm:$0xf]
    %v1244 = vld [vmem:[#allocation8 + $0x24] sm:$0xf]
    %v1245 = vld [vmem:[#allocation8 + $0x28] sm:$0xf]
    %v1246 = vld [vmem:[#allocation8 + $0x2c] sm:$0xf]
    %v1247 = vld [vmem:[#allocation8 + $0x30] sm:$0xf]
    %v1248 = vld [vmem:[#allocation8 + $0x34] sm:$0xf]
    %v1249 = vld [vmem:[#allocation8 + $0x38] sm:$0xf]
    %v1250 = vld [vmem:[#allocation8 + $0x3c] sm:$0xf]
    %v1251 = vld [vmem:[%s6] sm:$0x1]
    %v1253 = vlaneseq
    %v1254 = vshrl.u32 %v1253, 7
    %v1255 = vsub.s32 0, %v1254
    %v1256 = vrot.slane %v1251, %v1255
    %v1274 = vunpack.c.l.b16 %v1235
    %v1275 = vunpack.c.l.b16 %v1236
    %v1276 = vunpack.c.l.b16 %v1237
    %v1277 = vunpack.c.l.b16 %v1238
    %v1278 = vunpack.c.l.b16 %v1239
    %v1279 = vunpack.c.l.b16 %v1240
    %v1280 = vunpack.c.l.b16 %v1241
    %v1281 = vunpack.c.l.b16 %v1242
    %v1282 = vunpack.c.l.b16 %v1243
    %v1283 = vunpack.c.l.b16 %v1244
    %v1284 = vunpack.c.l.b16 %v1245
    %v1285 = vunpack.c.l.b16 %v1246
    %v1286 = vunpack.c.l.b16 %v1247
    %v1287 = vunpack.c.l.b16 %v1248
    %v1288 = vunpack.c.l.b16 %v1249
    %v1289 = vunpack.c.l.b16 %v1250
    %v1290 = vpack.c.b16 %v1275, %v1274
    %v1291 = vpack.c.b16 %v1277, %v1276
    %v1292 = vpack.c.b16 %v1279, %v1278
    %v1293 = vpack.c.b16 %v1281, %v1280
    %v1294 = vpack.c.b16 %v1283, %v1282
    %v1295 = vpack.c.b16 %v1285, %v1284
    %v1296 = vpack.c.b16 %v1287, %v1286
    %v1297 = vpack.c.b16 %v1289, %v1288
    %1306 = vmatprep.subr.bf16.mxu0 0
    %1307 = vmatpush1.bf16.msra.mxu0 %v1290
    %1308 = vmatprep.subr.bf16.mxu0 0
    %1309 = vmatpush1.bf16.msra.mxu0 %v1291
    %1310 = vmatprep.subr.bf16.mxu0 0
    %1311 = vmatpush1.bf16.msra.mxu0 %v1292
    %1312 = vmatprep.subr.bf16.mxu0 0
    %1313 = vmatpush1.bf16.msra.mxu0 %v1293
    %1314 = vmatprep.subr.bf16.mxu0 0
    %1315 = vmatpush1.bf16.msra.mxu0 %v1294
    %1316 = vmatprep.subr.bf16.mxu0 0
    %1317 = vmatpush1.bf16.msra.mxu0 %v1295
    %1318 = vmatprep.subr.bf16.mxu0 0
    %1319 = vmatpush1.bf16.msra.mxu0 %v1296
    %1320 = vmatprep.subr.bf16.mxu0 0
    %1321 = vmatpush1.bf16.msra.mxu0 %v1297
    %1322 = vmatprep.subr.bf16.mxu0 0
    %1323 = vmatpush1.bf16.msra.mxu0 0
    %1324 = vmatprep.subr.bf16.mxu0 0
    %1325 = vmatpush1.bf16.msra.mxu0 0
    %1326 = vmatprep.subr.bf16.mxu0 0
    %1327 = vmatpush1.bf16.msra.mxu0 0
    %1328 = vmatprep.subr.bf16.mxu0 0
    %1329 = vmatpush1.bf16.msra.mxu0 0
    %1330 = vmatprep.subr.bf16.mxu0 0
    %1331 = vmatpush1.bf16.msra.mxu0 0
    %1332 = vmatprep.subr.bf16.mxu0 0
    %1333 = vmatpush1.bf16.msra.mxu0 0
    %1334 = vmatprep.subr.bf16.mxu0 0
    %1335 = vmatpush1.bf16.msra.mxu0 0
    %1336 = vmatprep.subr.bf16.mxu0 0
    %1337 = vmatpush1.bf16.msra.mxu0 0
    %1338 = vmatprep.mubr.bf16.mxu0 0
    %1339 = vmatmul.mubr.bf16.gmra.mrb[0].mxu0 %v1234
    %v1340 = vpop.f32.mrb[0].mxu0
    %v1341 = vadd.f32 %v1256, %v1340
    %v1342 = vpop.f32.mrb[0].mxu0
    %v1343 = vpop.f32.mrb[0].mxu0
    %v1344 = vpop.f32.mrb[0].mxu0
    %1345 = vdwg.mxu0
    %1346 = vst [vmem:[#allocation10] sm:$0xff] %v1341
    // Predicated region
    $region46: #{tpu_custom_call.1} parent=1 // pred_check
      _
    $region47: #{tpu_custom_call.1} parent=1 // pred_check_branch
      %1348 = sbr.rel (0) target = $region49
    $region48: #{tpu_custom_call.1} parent=1 // pred_region
      %s1350 = ssub.s32 128, 128
      %1351 = vsyncadd [#allocation4], %s1350
      %s1353 = sshll.u32 [#allocation10], 4
      %s1354 = int_to_ptr.vmem [resolvable:$true] %s1353
      %1356 = dma.vmem_to_hbm [thread:$0]  %s1354, 128, %s7, [#allocation4]
    $region49: #{tpu_custom_call.1} parent=1 // pred_fallthru
      _
    // Predicated region
    $region50: #{tpu_custom_call.1} parent=1 // pred_check
      _
    $region51: #{tpu_custom_call.1} parent=1 // pred_check_branch
      %1358 = sbr.rel (0) target = $region53
    $region52: #{tpu_custom_call.1} parent=1 // pred_region
      %1359 = dma.done [#allocation4], 128
    $region53: #{tpu_custom_call.1} parent=1 // pred_fallthru
      _
    %1360 = vsyncpa [#allocation3], 1
    %1361 = vsyncpa [#allocation6], 1
    %1362 = vsyncpa [#allocation9], 1
    %1363 = vsyncpa [#allocation4], 1

</llo_original>
